<compile_context>
chip_gen: v5e
topology: v5e:2x2
jax: 0.10.0
libtpu: 0.0.40
codegen_flags: <defaults>
</compile_context>

<pallas_src>
import math
import numpy as np
import jax
import jax.numpy as jnp
from jax.experimental import pallas as pl
from jax.experimental.pallas import tpu as pltpu

EXTEND_BASE_SIZE = 4   # global constant referenced by the module (DNA bases)
LANE = 128
SUBLANE = 8


def calculate_output_size_conv1d(seq_size, kernel_size, stride):
    out_conv = (seq_size - 1 * (kernel_size - 1) - 1) / stride + 1
    return math.floor(out_conv)


def _round_up(x, m):
    return ((x + m - 1) // m) * m


# ---------------------------------------------------------------------------
# Parameter setup glue (host side, done once per set of weights).
# ---------------------------------------------------------------------------
def make_convtranspose_matrix(w, b, stride, l_in):
    """Dense scatter matrix for ConvTranspose1d.

    w: (C_in, C_out, K) PyTorch ConvTranspose1d weight layout.
    Returns Wt: (C_in*L_in, C_out*L_out), bt: (C_out*L_out,), L_out.
    out[n, co, j] = b[co] + sum_{ci,l,k: l*stride+k == j} in[n,ci,l] * w[ci,co,k]
    """
    c_in, c_out, k = w.shape
    l_out = (l_in - 1) * stride + k
    wt = np.zeros((c_in * l_in, c_out * l_out), dtype=np.float32)
    for ci in range(c_in):
        for l in range(l_in):
            for co in range(c_out):
                for kk in range(k):
                    wt[ci * l_in + l, co * l_out + (l * stride + kk)] += w[ci, co, kk]
    bt = np.tile(np.asarray(b, np.float32)[:, None], (1, l_out)).reshape(-1)
    return wt, bt, l_out


def pack_decoder_params(lin1_w, lin1_b, lin2_w, lin2_b, conv_w, conv_b,
                        stride, l_in):
    """Pack every parameter into one 128-lane-padded f32 slab (rows, W).

    Row layout (every segment starts on a multiple of 8 sublanes, zero-padded):
      [r_w1 : r_w1+latent_p)  W1^T   (latent, middle)  in lanes [0, middle)
      [r_b1]                  b1
      [r_w2 : r_w2+W)         W2^T   (middle, n_in)    rows >= middle are zero
      [r_b2]                  b2
      [r_wt : r_wt+W)         Wt     (n_in, n_out)     rows >= n_in are zero
      [r_bt]                  bt
    The zero rows guarantee that the padded columns of the intermediate
    activations (relu(0)=0 / sigmoid(0)=0.5) contribute exactly nothing to
    the next matmul.
    """
    lin1_w = np.asarray(lin1_w, np.float32)   # (middle, latent)  torch layout
    lin1_b = np.asarray(lin1_b, np.float32)
    lin2_w = np.asarray(lin2_w, np.float32)   # (n_in, middle)
    lin2_b = np.asarray(lin2_b, np.float32)
    conv_w = np.asarray(conv_w, np.float32)   # (C_in, C_out, K)
    conv_b = np.asarray(conv_b, np.float32)

    middle, latent = lin1_w.shape
    n_in = lin2_w.shape[0]                    # C_in * L_in
    c_in, c_out, k = conv_w.shape
    assert c_out == EXTEND_BASE_SIZE
    wt, bt, l_out = make_convtranspose_matrix(conv_w, conv_b, stride, l_in)
    n_out = c_out * l_out

    W = _round_up(max(middle, n_in, n_out, LANE), LANE)   # lane-dense width
    latent_p = _round_up(latent, SUBLANE)

    r_w1 = 0
    r_b1 = r_w1 + latent_p
    r_w2 = r_b1 + SUBLANE
    r_b2 = r_w2 + W
    r_wt = r_b2 + SUBLANE
    r_bt = r_wt + W
    rows = r_bt + SUBLANE

    slab = np.zeros((rows, W), np.float32)
    slab[r_w1:r_w1 + latent, :middle] = lin1_w.T
    slab[r_b1, :middle] = lin1_b
    slab[r_w2:r_w2 + middle, :n_in] = lin2_w.T
    slab[r_b2, :n_in] = lin2_b
    slab[r_wt:r_wt + n_in, :n_out] = wt
    slab[r_bt, :n_out] = bt

    layout = dict(latent=latent, latent_p=latent_p, width=W,
                  r_w1=r_w1, r_b1=r_b1, r_w2=r_w2, r_b2=r_b2,
                  r_wt=r_wt, r_bt=r_bt, n_out=n_out, l_out=l_out)
    return jnp.asarray(slab), layout


# ---------------------------------------------------------------------------
# Pallas kernel: three matmuls + activations on lane-dense 128-wide slabs.
# ---------------------------------------------------------------------------
def _make_decoder_kernel(layout, approx_sigmoid):
    latent_p = layout["latent_p"]
    W = layout["width"]
    r_w1, r_b1 = layout["r_w1"], layout["r_b1"]
    r_w2, r_b2 = layout["r_w2"], layout["r_b2"]
    r_wt, r_bt = layout["r_wt"], layout["r_bt"]

    def sigmoid(x):
        # exp and the (approximate) reciprocal both issue on the EUP slot.
        return pl.reciprocal(1.0 + jnp.exp(-x), approx=approx_sigmoid)

    def kernel(z_ref, p_ref, o_ref):
        z = z_ref[...]                                       # (TB, latent_p)
        # Static, 8-row-aligned, full-lane views of the resident weight slab
        # (zero-cost Ref slices; no data movement).
        w1 = p_ref[r_w1:r_w1 + latent_p, :]                  # (latent_p, W)
        b1 = p_ref[r_b1:r_b1 + 1, :]                         # (1, W)
        w2 = p_ref[r_w2:r_w2 + W, :]                         # (W, W)
        b2 = p_ref[r_b2:r_b2 + 1, :]
        wt = p_ref[r_wt:r_wt + W, :]                         # (W, W)
        bt = p_ref[r_bt:r_bt + 1, :]

        # linear1 + relu
        h1 = jnp.maximum(
            jnp.dot(z, w1, preferred_element_type=jnp.float32) + b1, 0.0)
        # linear2 + sigmoid
        h2 = sigmoid(jnp.dot(h1, w2, preferred_element_type=jnp.float32) + b2)
        # ConvTranspose1d (dense scatter matmul) + relu + sigmoid
        #   (yes, sigmoid(relu(x)) — exactly what the PyTorch module does)
        y = jnp.maximum(
            jnp.dot(h2, wt, preferred_element_type=jnp.float32) + bt, 0.0)
        o_ref[...] = sigmoid(y)

    return kernel


def decoder_forward(z, slab, layout, *, approx_sigmoid=True, batch_tile=256):
    """Full DecoderLayers forward.  batch_tile: 256 for v6e/v7x, 128 for v5e."""
    batch, latent = z.shape
    latent_p = layout["latent_p"]
    W = layout["width"]
    n_out = layout["n_out"]
    l_out = layout["l_out"]

    tb = min(batch_tile, _round_up(batch, SUBLANE))
    batch_pad = _round_up(batch, tb)
    z_p = jnp.zeros((batch_pad, latent_p), jnp.float32)
    z_p = z_p.at[:batch, :latent].set(z.astype(jnp.float32))

    kernel = _make_decoder_kernel(layout, approx_sigmoid)

    # TODO(synk): for repeated inference calls the ~144 KB weight slab could be
    # kept VMEM-resident across calls (cross-call prefetch / memory-space
    # constraint) instead of being re-fetched from HBM each invocation.
    flat = pl.pallas_call(
        kernel,
        out_shape=jax.ShapeDtypeStruct((batch_pad, W), jnp.float32),
        grid=(batch_pad // tb,),
        in_specs=[
            pl.BlockSpec((tb, latent_p), lambda i: (i, 0)),   # streamed input
            pl.BlockSpec(slab.shape, lambda i: (0, 0)),       # resident weights
        ],
        out_specs=pl.BlockSpec((tb, W), lambda i: (i, 0)),    # lane-dense out
        compiler_params=pltpu.CompilerParams(
            dimension_semantics=("parallel",)),               # megacore / 2-TC
    )(z_p, slab)

    # PyTorch: (B, bases, L_out) contiguous -> .reshape(B, L_out, bases) is a
    # pure flat-memory reinterpretation; reproduce with a flat reshape.
    return flat[:batch, :n_out].reshape(batch, l_out, EXTEND_BASE_SIZE)


# ---------------------------------------------------------------------------
# Pure numpy reference (mirrors the PyTorch forward exactly).
# ---------------------------------------------------------------------------
def reference_forward(z, lin1_w, lin1_b, lin2_w, lin2_b, conv_w, conv_b,
                      c_in_channels, l_in, stride):
    z = np.asarray(z, np.float32)
    h1 = np.maximum(z @ lin1_w.T + lin1_b, 0.0)
    h2 = 1.0 / (1.0 + np.exp(-(h1 @ lin2_w.T + lin2_b)))
    batch = z.shape[0]
    x = h2.reshape(batch, c_in_channels, l_in)           # (B, C_in, L_in)
    c_in, c_out, k = conv_w.shape
    l_out = (l_in - 1) * stride + k
    y = np.zeros((batch, c_out, l_out), np.float32)
    for ci in range(c_in):
        for l in range(l_in):
            for kk in range(k):
                y[:, :, l * stride + kk] += x[:, ci, None, l] * conv_w[ci, :, kk]
    y = y + conv_b[None, :, None]
    y = np.maximum(y, 0.0)
    y = 1.0 / (1.0 + np.exp(-y))
    return y.reshape(batch, l_out * c_out).reshape(batch, l_out, c_out)


if __name__ == "__main__":
    # Small, self-consistent hyperparameters.
    seq_size = 16
    conv_1_out_channels = 4
    conv_1_kernel_size = 4
    conv_1_stride = 2
    middle_dims = 32
    latent_dims = 8
    batch = 2

    conv_1_out_size = calculate_output_size_conv1d(
        seq_size, conv_1_kernel_size, conv_1_stride)          # = 7

    key = jax.random.PRNGKey(0)
    ks = jax.random.split(key, 8)

    # Deterministic parameter init (PyTorch layouts).
    lin1_w = (jax.random.uniform(ks[0], (middle_dims, latent_dims),
                                 minval=-1., maxval=1.) / math.sqrt(latent_dims)
              ).astype(jnp.float32)
    lin1_b = (jax.random.uniform(ks[1], (middle_dims,),
                                 minval=-1., maxval=1.) / math.sqrt(latent_dims)
              ).astype(jnp.float32)
    lin2_w = (jax.random.uniform(ks[2],
                                 (conv_1_out_size * conv_1_out_channels, middle_dims),
                                 minval=-1., maxval=1.) / math.sqrt(middle_dims)
              ).astype(jnp.float32)
    lin2_b = (jax.random.uniform(ks[3], (conv_1_out_size * conv_1_out_channels,),
                                 minval=-1., maxval=1.) / math.sqrt(middle_dims)
              ).astype(jnp.float32)
    conv_w = (jax.random.uniform(
        ks[4], (conv_1_out_channels, EXTEND_BASE_SIZE, conv_1_kernel_size),
        minval=-1., maxval=1.) / math.sqrt(conv_1_out_channels * conv_1_kernel_size)
              ).astype(jnp.float32)
    conv_b = (jax.random.uniform(ks[5], (EXTEND_BASE_SIZE,),
                                 minval=-1., maxval=1.)
              / math.sqrt(conv_1_out_channels * conv_1_kernel_size)).astype(jnp.float32)

    z = jax.random.normal(ks[6], (batch, latent_dims), dtype=jnp.float32)

    # Pack all parameters into a single 128-lane-padded VMEM slab.
    slab, layout = pack_decoder_params(
        np.asarray(lin1_w), np.asarray(lin1_b),
        np.asarray(lin2_w), np.asarray(lin2_b),
        np.asarray(conv_w), np.asarray(conv_b),
        conv_1_stride, conv_1_out_size)

    # Fast path (approximate EUP reciprocal in the sigmoids).
    out = decoder_forward(z, slab, layout, approx_sigmoid=True)
    out = jax.block_until_ready(out)

    # Exact-reciprocal variant: validates the layout/packing math against the
    # reference to tight tolerance.
    out_exact = decoder_forward(z, slab, layout, approx_sigmoid=False)
    out_exact = jax.block_until_ready(out_exact)

    ref = reference_forward(np.asarray(z),
                            np.asarray(lin1_w), np.asarray(lin1_b),
                            np.asarray(lin2_w), np.asarray(lin2_b),
                            np.asarray(conv_w), np.asarray(conv_b),
                            conv_1_out_channels, conv_1_out_size, conv_1_stride)

    l_out = layout["l_out"]
    assert out.shape == (batch, l_out, EXTEND_BASE_SIZE)
    np.testing.assert_allclose(np.asarray(out_exact), ref, rtol=1e-5, atol=1e-5)
    # Approximate-reciprocal path: looser tolerance (EUP vrcp is ~bf16-level).
    np.testing.assert_allclose(np.asarray(out), ref, rtol=2e-2, atol=2e-2)
    print("KERNEL_OK")
</pallas_src>

<mosaic_0001>
module attributes {stable_mosaic.version = 11 : i64} {
  func.func @kernel(%arg0: i32, %arg1: memref<8x8xf32, #tpu.memory_space<vmem>>, %arg2: memref<288x128xf32, #tpu.memory_space<vmem>>, %arg3: memref<8x128xf32, #tpu.memory_space<vmem>>) attributes {dimension_semantics = [#tpu.dimension_semantics<parallel>], iteration_bounds = array<i64: 1>, scalar_prefetch = 0 : i64, scratch_operands = 0 : i64, tpu.core_type = #tpu.core_type<tc>, window_params = [{transform_indices = @transform_0, window_bounds = array<i64: 8, 8>}, {pipeline_mode = #tpu.pipeline_mode<synchronous>, transform_indices = @transform_1, window_bounds = array<i64: 288, 128>}, {transform_indices = @transform_2, window_bounds = array<i64: 8, 128>}]} {
    %c0 = arith.constant 0 : index
    %c0_0 = arith.constant 0 : index
    %0 = vector.load %arg1[%c0, %c0_0] : memref<8x8xf32, #tpu.memory_space<vmem>>, vector<8x8xf32>
    %c0_1 = arith.constant 0 : index
    %c0_2 = arith.constant 0 : index
    %1 = vector.load %arg2[%c0_1, %c0_2] : memref<288x128xf32, #tpu.memory_space<vmem>>, vector<8x128xf32>
    %c8 = arith.constant 8 : index
    %c0_3 = arith.constant 0 : index
    %2 = vector.load %arg2[%c8, %c0_3] : memref<288x128xf32, #tpu.memory_space<vmem>>, vector<1x128xf32>
    %c16 = arith.constant 16 : index
    %c0_4 = arith.constant 0 : index
    %3 = vector.load %arg2[%c16, %c0_4] : memref<288x128xf32, #tpu.memory_space<vmem>>, vector<128x128xf32>
    %c144 = arith.constant 144 : index
    %c0_5 = arith.constant 0 : index
    %4 = vector.load %arg2[%c144, %c0_5] : memref<288x128xf32, #tpu.memory_space<vmem>>, vector<1x128xf32>
    %c152 = arith.constant 152 : index
    %c0_6 = arith.constant 0 : index
    %5 = vector.load %arg2[%c152, %c0_6] : memref<288x128xf32, #tpu.memory_space<vmem>>, vector<128x128xf32>
    %c280 = arith.constant 280 : index
    %c0_7 = arith.constant 0 : index
    %6 = vector.load %arg2[%c280, %c0_7] : memref<288x128xf32, #tpu.memory_space<vmem>>, vector<1x128xf32>
    %cst = arith.constant dense<0.000000e+00> : vector<8x128xf32>
    %7 = tpu.matmul %0, %1, %cst {dimension_numbers = #tpu.dot_dimension_numbers<[1], [0], [0], [1], [0, 0, 1, 1], [], []>} : vector<8x8xf32>, vector<8x128xf32>, vector<8x128xf32> -> vector<8x128xf32>
    %8 = vector.broadcast %2 : vector<1x128xf32> to vector<8x128xf32>
    %9 = arith.addf %7, %8 : vector<8x128xf32>
    %cst_8 = arith.constant 0.000000e+00 : f32
    %10 = vector.broadcast %cst_8 : f32 to vector<8x128xf32>
    %11 = arith.maximumf %9, %10 : vector<8x128xf32>
    %cst_9 = arith.constant dense<0.000000e+00> : vector<8x128xf32>
    %12 = tpu.matmul %11, %3, %cst_9 {dimension_numbers = #tpu.dot_dimension_numbers<[1], [0], [0], [1], [0, 0, 1, 1], [], []>} : vector<8x128xf32>, vector<128x128xf32>, vector<8x128xf32> -> vector<8x128xf32>
    %13 = vector.broadcast %4 : vector<1x128xf32> to vector<8x128xf32>
    %14 = arith.addf %12, %13 : vector<8x128xf32>
    %cst_10 = arith.constant 0.000000e+00 : f32
    %15 = vector.broadcast %cst_10 : f32 to vector<8x128xf32>
    %16 = arith.subf %15, %14 : vector<8x128xf32>
    %17 = math.exp %16 : vector<8x128xf32>
    %cst_11 = arith.constant 1.000000e+00 : f32
    %18 = vector.broadcast %cst_11 : f32 to vector<8x128xf32>
    %19 = arith.addf %18, %17 : vector<8x128xf32>
    %20 = tpu.reciprocal %19 {approx = true} : vector<8x128xf32> -> vector<8x128xf32>
    %cst_12 = arith.constant dense<0.000000e+00> : vector<8x128xf32>
    %21 = tpu.matmul %20, %5, %cst_12 {dimension_numbers = #tpu.dot_dimension_numbers<[1], [0], [0], [1], [0, 0, 1, 1], [], []>} : vector<8x128xf32>, vector<128x128xf32>, vector<8x128xf32> -> vector<8x128xf32>
    %22 = vector.broadcast %6 : vector<1x128xf32> to vector<8x128xf32>
    %23 = arith.addf %21, %22 : vector<8x128xf32>
    %cst_13 = arith.constant 0.000000e+00 : f32
    %24 = vector.broadcast %cst_13 : f32 to vector<8x128xf32>
    %25 = arith.maximumf %23, %24 : vector<8x128xf32>
    %cst_14 = arith.constant 0.000000e+00 : f32
    %26 = vector.broadcast %cst_14 : f32 to vector<8x128xf32>
    %27 = arith.subf %26, %25 : vector<8x128xf32>
    %28 = math.exp %27 : vector<8x128xf32>
    %cst_15 = arith.constant 1.000000e+00 : f32
    %29 = vector.broadcast %cst_15 : f32 to vector<8x128xf32>
    %30 = arith.addf %29, %28 : vector<8x128xf32>
    %31 = tpu.reciprocal %30 {approx = true} : vector<8x128xf32> -> vector<8x128xf32>
    %c0_16 = arith.constant 0 : index
    %c0_17 = arith.constant 0 : index
    %32 = vector.load %arg3[%c0_16, %c0_17] : memref<8x128xf32, #tpu.memory_space<vmem>>, vector<8x128xf32>
    tpu.vector_store %arg3[%c0_16, %c0_17], %31 {strides = array<i32>} : memref<8x128xf32, #tpu.memory_space<vmem>>, vector<8x128xf32>,
    return
  }
  func.func @transform_0(%arg0: i32) -> (i32, i32) {
    %c0_i32 = arith.constant 0 : i32
    %c0_i32_0 = arith.constant 0 : i32
    return %arg0, %c0_i32 : i32, i32
  }
  func.func @transform_1(%arg0: i32) -> (i32, i32) {
    %c0_i32 = arith.constant 0 : i32
    %c0_i32_0 = arith.constant 0 : i32
    %c0_i32_1 = arith.constant 0 : i32
    return %c0_i32, %c0_i32_0 : i32, i32
  }
  func.func @transform_2(%arg0: i32) -> (i32, i32) {
    %c0_i32 = arith.constant 0 : i32
    %c0_i32_0 = arith.constant 0 : i32
    return %arg0, %c0_i32 : i32, i32
  }
}

</mosaic_0001>

<llo_original>
// kernel: tpu_custom_call.1
$region0: #{tpu_custom_call.1}
  #allocation0 [shape = 'u32[]', space=smem, size = 0x4, offset = 0x4, fixed_abs, tag = 'smem constant byte address 0x4 - core index']
  #allocation1 [shape = 'u32[72,128]{1,0:T(1,128)}', space=vmem, size = 0x9000, scoped, tag = 'internal scratch']
  %s0 = inlined_call_operand.hbm [shape: f32[8,8], index: 0, kind: input, shape index: {}]
  %s1 = inlined_call_operand.hbm [shape: f32[288,128], index: 1, kind: input, shape index: {}]
  %s2 = inlined_call_operand.hbm [shape: f32[8,128], index: 2, kind: output, shape index: {}]
  %s3 = sld [smem:[#allocation0]]
  $region26: #{tpu_custom_call.1} parent=0
    _
  %s5 = ssub.s32 1, %s3
  %s6 = scalar_select 0, %s5, %s3
  $region1: #{tpu_custom_call.1} parent=0
    #allocation2 [shape = 'u8[4096]{0}', space=vmem, size = 0x1000, scoped, tag = 'input window, operand 0, single buffered']
    #allocation3 [shape = 's32[1]{0}', space=sflag, size = 0x4, scoped, tag = 'scoped memory for tpu_custom_call.1']
    #allocation4 [shape = 's32[1]{0}', space=sflag, size = 0x4, scoped, tag = 'scoped memory for tpu_custom_call.1']
    #allocation5 [shape = 'u8[147456]{0}', space=vmem, size = 0x24000, scoped, tag = 'input window, operand 1, single buffered']
    #allocation6 [shape = 's32[1]{0}', space=sflag, size = 0x4, scoped, tag = 'scoped memory for tpu_custom_call.1']
    #allocation7 [shape = 'u8[4096]{0}', space=vmem, size = 0x1000, scoped, tag = 'output window, operand 0, single buffered']
    %7 = vsyncpa [#allocation3], 0
    %8 = vsyncpa [#allocation6], 0
    %9 = vsyncpa [#allocation4], 0
    // Predicated region
    $region2: #{tpu_custom_call.1} parent=1 // pred_check
      _
    $region3: #{tpu_custom_call.1} parent=1 // pred_check_branch
      %11 = sbr.rel (0) target = $region5
    $region4: #{tpu_custom_call.1} parent=1 // pred_region
      %13 = vsyncadd [#allocation3], 0
      %s15 = sshll.u32 %s0, 4
      %s16 = int_to_ptr.hbm [resolvable:$true] %s15
      %s17 = sshll.u32 [#allocation2], 4
      %s18 = int_to_ptr.vmem [resolvable:$true] %s17
      %20 = dma.hbm_to_vmem [thread:$0]  %s16, 128, %s18, [#allocation3]
    $region5: #{tpu_custom_call.1} parent=1 // pred_fallthru
      _
    // Predicated region
    $region6: #{tpu_custom_call.1} parent=1 // pred_check
      _
    $region7: #{tpu_custom_call.1} parent=1 // pred_check_branch
      %22 = sbr.rel (0) target = $region9
    $region8: #{tpu_custom_call.1} parent=1 // pred_region
      %24 = vsyncadd [#allocation6], 0
      %s25 = sshll.u32 %s1, 4
      %s26 = int_to_ptr.hbm [resolvable:$true] %s25
      %s27 = sshll.u32 [#allocation5], 4
      %s28 = int_to_ptr.vmem [resolvable:$true] %s27
      %33 = dma.hbm_to_vmem [thread:$0]  %s26, 4608, %s28, [#allocation6], 128, 128, 8
    $region9: #{tpu_custom_call.1} parent=1 // pred_fallthru
      _
    // Predicated region
    $region10: #{tpu_custom_call.1} parent=1 // pred_check
      _
    $region11: #{tpu_custom_call.1} parent=1 // pred_check_branch
      %35 = sbr.rel (0) target = $region13
    $region12: #{tpu_custom_call.1} parent=1 // pred_region
      %37 = dma.done [#allocation3], 128
    $region13: #{tpu_custom_call.1} parent=1 // pred_fallthru
      _
    // Predicated region
    $region14: #{tpu_custom_call.1} parent=1 // pred_check
      _
    $region15: #{tpu_custom_call.1} parent=1 // pred_check_branch
      %39 = sbr.rel (0) target = $region17
    $region16: #{tpu_custom_call.1} parent=1 // pred_region
      %41 = dma.done [#allocation6], 4608
    $region17: #{tpu_custom_call.1} parent=1 // pred_fallthru
      _
    %v42 = vld [vmem:[#allocation2] sm:$0xff]
    %v43 = vld [vmem:[#allocation5] sm:$0xff]
    %v44 = vld [vmem:[#allocation5 + $0x8] sm:$0x1]
    %v45 = vld [vmem:[#allocation5 + $0x10] sm:$0xff]
    %v46 = vld [vmem:[#allocation5 + $0x18] sm:$0xff]
    %v47 = vld [vmem:[#allocation5 + $0x20] sm:$0xff]
    %v48 = vld [vmem:[#allocation5 + $0x28] sm:$0xff]
    %v49 = vld [vmem:[#allocation5 + $0x30] sm:$0xff]
    %v50 = vld [vmem:[#allocation5 + $0x38] sm:$0xff]
    %v51 = vld [vmem:[#allocation5 + $0x40] sm:$0xff]
    %v52 = vld [vmem:[#allocation5 + $0x48] sm:$0xff]
    %v53 = vld [vmem:[#allocation5 + $0x50] sm:$0xff]
    %v54 = vld [vmem:[#allocation5 + $0x58] sm:$0xff]
    %v55 = vld [vmem:[#allocation5 + $0x60] sm:$0xff]
    %v56 = vld [vmem:[#allocation5 + $0x68] sm:$0xff]
    %v57 = vld [vmem:[#allocation5 + $0x70] sm:$0xff]
    %v58 = vld [vmem:[#allocation5 + $0x78] sm:$0xff]
    %v59 = vld [vmem:[#allocation5 + $0x80] sm:$0xff]
    %v60 = vld [vmem:[#allocation5 + $0x88] sm:$0xff]
    %v61 = vld [vmem:[#allocation5 + $0x90] sm:$0x1]
    %v62 = vld [vmem:[#allocation5 + $0x98] sm:$0xff]
    %v63 = vld [vmem:[#allocation5 + $0xa0] sm:$0xff]
    %v64 = vld [vmem:[#allocation5 + $0xa8] sm:$0xff]
    %v65 = vld [vmem:[#allocation5 + $0xb0] sm:$0xff]
    %v66 = vld [vmem:[#allocation5 + $0xb8] sm:$0xff]
    %v67 = vld [vmem:[#allocation5 + $0xc0] sm:$0xff]
    %v68 = vld [vmem:[#allocation5 + $0xc8] sm:$0xff]
    %v69 = vld [vmem:[#allocation5 + $0xd0] sm:$0xff]
    %v70 = vld [vmem:[#allocation5 + $0xd8] sm:$0xff]
    %v71 = vld [vmem:[#allocation5 + $0xe0] sm:$0xff]
    %v72 = vld [vmem:[#allocation5 + $0xe8] sm:$0xff]
    %v73 = vld [vmem:[#allocation5 + $0xf0] sm:$0xff]
    %v74 = vld [vmem:[#allocation5 + $0xf8] sm:$0xff]
    %v75 = vld [vmem:[#allocation5 + $0x100] sm:$0xff]
    %v76 = vld [vmem:[#allocation5 + $0x108] sm:$0xff]
    %v77 = vld [vmem:[#allocation5 + $0x110] sm:$0xff]
    %v78 = vld [vmem:[#allocation5 + $0x118] sm:$0x1]
    %v79 = vperm.slane %v44, 0
    %vm80 = vcmask 64512
    %v82 = vsel %vm80, %v42, 0
    %84 = vmatpush.msra.mxu0 0.0
    %85 = vmatpush.msra.mxu0 0.0
    %86 = vmatpush.msra.mxu0 0.0
    %87 = vmatpush.msra.mxu0 0.0
    %88 = vmatpush.msra.mxu0 0.0
    %89 = vmatpush.msra.mxu0 0.0
    %90 = vmatpush.msra.mxu0 0.0
    %91 = vmatpush.msra.mxu0 0.0
    %92 = vmatpush.msra.mxu0 0.0
    %93 = vmatpush.msra.mxu0 0.0
    %94 = vmatpush.msra.mxu0 0.0
    %95 = vmatpush.msra.mxu0 0.0
    %96 = vmatpush.msra.mxu0 0.0
    %97 = vmatpush.msra.mxu0 0.0
    %98 = vmatpush.msra.mxu0 0.0
    %99 = vmatpush.msra.mxu0 %v43
    %100 = vmatmul.f32.gmra.mxu0 %v82
    %v101 = vpop.f32.mrf.mxu0
    %v102 = vadd.f32 %v79, %v101
    %103 = vdwg.mxu0
    %v104 = vmax.f32 %v102, 0.0
    %v105 = vperm.slane %v61, 0
    %106 = vmatpush.msra.mxu0 %v60
    %107 = vmatpush.msra.mxu0 %v59
    %108 = vmatpush.msra.mxu0 %v58
    %109 = vmatpush.msra.mxu0 %v57
    %110 = vmatpush.msra.mxu0 %v56
    %111 = vmatpush.msra.mxu0 %v55
    %112 = vmatpush.msra.mxu0 %v54
    %113 = vmatpush.msra.mxu0 %v53
    %114 = vmatpush.msra.mxu0 %v52
    %115 = vmatpush.msra.mxu0 %v51
    %116 = vmatpush.msra.mxu0 %v50
    %117 = vmatpush.msra.mxu0 %v49
    %118 = vmatpush.msra.mxu0 %v48
    %119 = vmatpush.msra.mxu0 %v47
    %120 = vmatpush.msra.mxu0 %v46
    %121 = vmatpush.msra.mxu0 %v45
    %122 = vmatmul.f32.gmra.mxu0 %v104
    %v123 = vpop.f32.mrf.mxu0
    %v124 = vadd.f32 %v105, %v123
    %125 = vdwg.mxu0
    %v126 = vsub.f32 0.0, %v124
    %v127 = vmul.f32 %v126, 1.442695
    %v128 = vpow.pop %v127
    %v129 = vadd.f32 %v128, 1.0
    %v130 = vrcp.pop %v129
    %v131 = vperm.slane %v78, 0
    %132 = vmatpush.msra.mxu0 %v77
    %133 = vmatpush.msra.mxu0 %v76
    %134 = vmatpush.msra.mxu0 %v75
    %135 = vmatpush.msra.mxu0 %v74
    %136 = vmatpush.msra.mxu0 %v73
    %137 = vmatpush.msra.mxu0 %v72
    %138 = vmatpush.msra.mxu0 %v71
    %139 = vmatpush.msra.mxu0 %v70
    %140 = vmatpush.msra.mxu0 %v69
    %141 = vmatpush.msra.mxu0 %v68
    %142 = vmatpush.msra.mxu0 %v67
    %143 = vmatpush.msra.mxu0 %v66
    %144 = vmatpush.msra.mxu0 %v65
    %145 = vmatpush.msra.mxu0 %v64
    %146 = vmatpush.msra.mxu0 %v63
    %147 = vmatpush.msra.mxu0 %v62
    %148 = vmatmul.f32.gmra.mxu0 %v130
    %v149 = vpop.f32.mrf.mxu0
    %v150 = vadd.f32 %v131, %v149
    %151 = vdwg.mxu0
    %v152 = vmax.f32 %v150, 0.0
    %v153 = vsub.f32 0.0, %v152
    %v154 = vmul.f32 %v153, 1.442695
    %v155 = vpow.pop %v154
    %v156 = vadd.f32 %v155, 1.0
    %v157 = vrcp.pop %v156
    %158 = vst [vmem:[#allocation7] sm:$0xff] %v157
    // Predicated region
    $region18: #{tpu_custom_call.1} parent=1 // pred_check
      _
    $region19: #{tpu_custom_call.1} parent=1 // pred_check_branch
      %160 = sbr.rel (0) target = $region21
    $region20: #{tpu_custom_call.1} parent=1 // pred_region
      %162 = vsyncadd [#allocation4], 0
      %s164 = sshll.u32 [#allocation7], 4
      %s165 = int_to_ptr.vmem [resolvable:$true] %s164
      %s166 = sshll.u32 %s2, 4
      %s167 = int_to_ptr.hbm [resolvable:$true] %s166
      %169 = dma.vmem_to_hbm [thread:$0]  %s165, 128, %s167, [#allocation4]
    $region21: #{tpu_custom_call.1} parent=1 // pred_fallthru
      _
    // Predicated region
    $region22: #{tpu_custom_call.1} parent=1 // pred_check
      _
    $region23: #{tpu_custom_call.1} parent=1 // pred_check_branch
      %171 = sbr.rel (0) target = $region25
    $region24: #{tpu_custom_call.1} parent=1 // pred_region
      %173 = dma.done [#allocation4], 128
    $region25: #{tpu_custom_call.1} parent=1 // pred_fallthru
      _
    %174 = vsyncpa [#allocation3], 1
    %175 = vsyncpa [#allocation6], 1
    %176 = vsyncpa [#allocation4], 1

</llo_original>
